<compile_context>
chip_gen: v5e
topology: v5e:2x2
jax: 0.10.0
libtpu: 0.0.40
codegen_flags: <defaults>
</compile_context>

<pallas_src>
import jax
import jax.numpy as jnp
from jax import lax
from jax.experimental import pallas as pl
from jax.experimental.pallas import tpu as pltpu

MAX_TB = 256                       # max tokens per grid step
MAX_TABLE_BLOCK_BYTES = 4 << 20    # per-step embedding-table slab budget (VMEM)


def _round_up(x, m):
    return ((x + m - 1) // m) * m


def _embedding_kernel(idx_ref, w_ref, o_ref):
    # idx_ref: (TB, 1)         int32 -- token ids for this tile (sublane axis)
    # w_ref:   (NC_CHUNK, EDp) f32   -- one class-chunk of the (padded) table
    # o_ref:   (TB, EDp)       f32   -- output tile (resident across the k axis)
    k = pl.program_id(1)
    tb = idx_ref.shape[0]
    ncc = w_ref.shape[0]

    base = k * ncc
    local_ids = idx_ref[...] - base                           # (TB, 1)
    cols = lax.broadcasted_iota(jnp.int32, (tb, ncc), 1)      # (TB, NCC)
    one_hot = (cols == local_ids).astype(w_ref.dtype)         # (TB, NCC)

    # Single MXU pass per chunk: gather-as-matmul (exact: 0*x + 1*row).
    partial = jnp.dot(
        one_hot, w_ref[...], preferred_element_type=jnp.float32
    ).astype(o_ref.dtype)

    @pl.when(k == 0)
    def _():
        o_ref[...] = partial

    @pl.when(k > 0)
    def _():
        # Exact even in low precision: at most one chunk contributes a nonzero row.
        o_ref[...] += partial


def embedding_forward(x, w2v_weight):
    """Pallas equivalent of EmbeddingLayer.forward (self.emb(x))."""
    num_classes, emb_dim = w2v_weight.shape
    orig_shape = x.shape

    # Flatten, clamp (gather semantics; avoids OOB), pad tokens to a TB multiple.
    idx = jnp.clip(x.reshape(-1).astype(jnp.int32), 0, num_classes - 1)
    n = idx.shape[0]
    tb = min(MAX_TB, _round_up(max(n, 1), 8))
    n_pad = _round_up(max(n, 1), tb)
    idx = jnp.pad(idx, (0, n_pad - n)).reshape(n_pad, 1)

    # Pad emb_dim to 128 lanes; chunk/pad the class axis so each table slab is
    # (8,128)-tile aligned and bounded in VMEM.
    edp = _round_up(emb_dim, 128)
    itemsize = jnp.dtype(w2v_weight.dtype).itemsize
    rows_budget = max(8, (MAX_TABLE_BLOCK_BYTES // (edp * itemsize)) // 8 * 8)
    nc_chunk = min(_round_up(num_classes, 8), rows_budget)
    ncp = _round_up(num_classes, nc_chunk)

    w = w2v_weight
    if (ncp, edp) != (num_classes, emb_dim):
        w = jnp.pad(w, ((0, ncp - num_classes), (0, edp - emb_dim)))

    num_blocks = n_pad // tb
    nc_blocks = ncp // nc_chunk
    table_bytes = ncp * edp * itemsize
    out_bytes = n_pad * edp * itemsize

    out = pl.pallas_call(
        _embedding_kernel,
        out_shape=jax.ShapeDtypeStruct((n_pad, edp), w.dtype),
        grid=(num_blocks, nc_blocks),
        in_specs=[
            # Per-token-tile slab of ids; constant across the class-chunk axis.
            pl.BlockSpec((tb, 1), lambda i, k: (i, 0)),
            # Streamed class-chunk of the embedding table.
            pl.BlockSpec((nc_chunk, edp), lambda i, k: (k, 0)),
        ],
        # Same output block across k -> stays VMEM-resident, acts as accumulator.
        out_specs=pl.BlockSpec((tb, edp), lambda i, k: (i, 0)),
        compiler_params=pltpu.CompilerParams(
            dimension_semantics=("parallel", "arbitrary"),
        ),
        cost_estimate=pl.CostEstimate(
            flops=2 * n_pad * ncp * edp,
            transcendentals=0,
            bytes_accessed=n_pad * 4 + table_bytes * num_blocks + out_bytes,
        ),
    )(idx, w)

    out = out[:n, :emb_dim]
    return out.reshape(*orig_shape, emb_dim)


if __name__ == "__main__":
    # Small, deterministic setup consistent with the module:
    # num_classes classes, embedding dim = num_classes - 1.
    num_classes = 129
    emb_dim = num_classes - 1          # 128 -> lane-aligned
    batch, seq = 2, 8

    key = jax.random.PRNGKey(0)
    k_w, k_x = jax.random.split(key)
    # Deterministic "w2v_weight" parameter (synthetic, not a checkpoint).
    w2v_weight = jax.random.normal(k_w, (num_classes, emb_dim), dtype=jnp.float32)
    x = jax.random.randint(k_x, (batch, seq), 0, num_classes, dtype=jnp.int32)

    out = jax.block_until_ready(embedding_forward(x, w2v_weight))

    # Reference check against plain JAX gather (== nn.Embedding semantics).
    ref = w2v_weight[x]
    assert out.shape == (batch, seq, emb_dim)
    assert jnp.allclose(out, ref), "Pallas embedding mismatch vs reference"

    print("KERNEL_OK")
</pallas_src>

<mosaic_0001>
module attributes {stable_mosaic.version = 11 : i64} {
  func.func @_embedding_kernel(%arg0: i32, %arg1: i32, %arg2: memref<16x1xi32, #tpu.memory_space<vmem>>, %arg3: memref<136x128xf32, #tpu.memory_space<vmem>>, %arg4: memref<16x128xf32, #tpu.memory_space<vmem>>) attributes {dimension_semantics = [#tpu.dimension_semantics<parallel>, #tpu.dimension_semantics<arbitrary>], iteration_bounds = array<i64: 1, 1>, scalar_prefetch = 0 : i64, scratch_operands = 0 : i64, tpu.core_type = #tpu.core_type<tc>, window_params = [{transform_indices = @transform_0, window_bounds = array<i64: 16, 1>}, {transform_indices = @transform_1, window_bounds = array<i64: 136, 128>}, {transform_indices = @transform_2, window_bounds = array<i64: 16, 128>}]} {
    %c136_i32 = arith.constant 136 : i32
    %0 = arith.muli %arg1, %c136_i32 : i32
    %c0 = arith.constant 0 : index
    %c0_0 = arith.constant 0 : index
    %1 = vector.load %arg2[%c0, %c0_0] : memref<16x1xi32, #tpu.memory_space<vmem>>, vector<16x1xi32>
    %2 = vector.broadcast %0 : i32 to vector<16x1xi32>
    %3 = arith.subi %1, %2 : vector<16x1xi32>
    %4 = tpu.iota {dimensions = array<i32: 1>} : vector<16x136xi32>
    %5 = vector.broadcast %3 : vector<16x1xi32> to vector<16x136xi32>
    %6 = arith.cmpi eq, %4, %5 : vector<16x136xi32>
    %7 = arith.extui %6 : vector<16x136xi1> to vector<16x136xi32>
    %8 = arith.sitofp %7 : vector<16x136xi32> to vector<16x136xf32>
    %c0_1 = arith.constant 0 : index
    %c0_2 = arith.constant 0 : index
    %9 = vector.load %arg3[%c0_1, %c0_2] : memref<136x128xf32, #tpu.memory_space<vmem>>, vector<136x128xf32>
    %cst = arith.constant dense<0.000000e+00> : vector<16x128xf32>
    %10 = tpu.matmul %8, %9, %cst {dimension_numbers = #tpu.dot_dimension_numbers<[1], [0], [0], [1], [0, 0, 1, 1], [], []>} : vector<16x136xf32>, vector<136x128xf32>, vector<16x128xf32> -> vector<16x128xf32>
    %c0_i32 = arith.constant 0 : i32
    %11 = arith.cmpi eq, %arg1, %c0_i32 : i32
    %12 = arith.extui %11 : i1 to i32
    %c0_i32_3 = arith.constant 0 : i32
    %13 = arith.cmpi ne, %12, %c0_i32_3 : i32
    scf.if %13 {
      %c0_6 = arith.constant 0 : index
      %c0_7 = arith.constant 0 : index
      %17 = vector.load %arg4[%c0_6, %c0_7] : memref<16x128xf32, #tpu.memory_space<vmem>>, vector<16x128xf32>
      tpu.vector_store %arg4[%c0_6, %c0_7], %10 {strides = array<i32>} : memref<16x128xf32, #tpu.memory_space<vmem>>, vector<16x128xf32>,
    } else {
    }
    %c0_i32_4 = arith.constant 0 : i32
    %14 = arith.cmpi sgt, %arg1, %c0_i32_4 : i32
    %15 = arith.extui %14 : i1 to i32
    %c0_i32_5 = arith.constant 0 : i32
    %16 = arith.cmpi ne, %15, %c0_i32_5 : i32
    scf.if %16 {
      %c0_6 = arith.constant 0 : index
      %c0_7 = arith.constant 0 : index
      %17 = vector.load %arg4[%c0_6, %c0_7] : memref<16x128xf32, #tpu.memory_space<vmem>>, vector<16x128xf32>
      %18 = arith.addf %17, %10 : vector<16x128xf32>
      %c0_8 = arith.constant 0 : index
      %c0_9 = arith.constant 0 : index
      %19 = vector.load %arg4[%c0_8, %c0_9] : memref<16x128xf32, #tpu.memory_space<vmem>>, vector<16x128xf32>
      tpu.vector_store %arg4[%c0_8, %c0_9], %18 {strides = array<i32>} : memref<16x128xf32, #tpu.memory_space<vmem>>, vector<16x128xf32>,
    } else {
    }
    return
  }
  func.func @transform_0(%arg0: i32, %arg1: i32) -> (i32, i32) {
    %c0_i32 = arith.constant 0 : i32
    %c0_i32_0 = arith.constant 0 : i32
    return %arg0, %c0_i32 : i32, i32
  }
  func.func @transform_1(%arg0: i32, %arg1: i32) -> (i32, i32) {
    %c0_i32 = arith.constant 0 : i32
    %c0_i32_0 = arith.constant 0 : i32
    return %arg1, %c0_i32 : i32, i32
  }
  func.func @transform_2(%arg0: i32, %arg1: i32) -> (i32, i32) {
    %c0_i32 = arith.constant 0 : i32
    %c0_i32_0 = arith.constant 0 : i32
    return %arg0, %c0_i32 : i32, i32
  }
}

</mosaic_0001>

<llo_original>
// kernel: tpu_custom_call.1
$region0: #{tpu_custom_call.1}
  #allocation0 [shape = 'u32[]', space=smem, size = 0x4, offset = 0x4, fixed_abs, tag = 'smem constant byte address 0x4 - core index']
  #allocation1 [shape = 'u32[72,128]{1,0:T(1,128)}', space=vmem, size = 0x9000, scoped, tag = 'internal scratch']
  %s0 = inlined_call_operand.vmem [shape: s32[16,1], index: 0, kind: input, shape index: {}]
  %s1 = inlined_call_operand.hbm [shape: f32[136,128], index: 1, kind: input, shape index: {}]
  %s2 = inlined_call_operand.hbm [shape: f32[16,128], index: 2, kind: output, shape index: {}]
  %s3 = sld [smem:[#allocation0]]
  $region30: #{tpu_custom_call.1} parent=0
    _
  %s5 = ssub.s32 1, %s3
  %s6 = scalar_select 0, %s5, %s3
  $region1: #{tpu_custom_call.1} parent=0
    #allocation2 [shape = 'u8[69632]{0}', space=vmem, size = 0x11000, scoped, tag = 'input window, operand 1, single buffered']
    #allocation3 [shape = 's32[1]{0}', space=sflag, size = 0x4, scoped, tag = 'scoped memory for tpu_custom_call.1']
    #allocation4 [shape = 's32[1]{0}', space=sflag, size = 0x4, scoped, tag = 'scoped memory for tpu_custom_call.1']
    #allocation5 [shape = 'u8[8192]{0}', space=vmem, size = 0x2000, scoped, tag = 'output window, operand 0, single buffered']
    %7 = vsyncpa [#allocation3], 0
    %8 = vsyncpa [#allocation4], 0
    // Predicated region
    $region2: #{tpu_custom_call.1} parent=1 // pred_check
      _
    $region3: #{tpu_custom_call.1} parent=1 // pred_check_branch
      %10 = sbr.rel (0) target = $region5
    $region4: #{tpu_custom_call.1} parent=1 // pred_region
      _
    $region5: #{tpu_custom_call.1} parent=1 // pred_fallthru
      _
    // Predicated region
    $region6: #{tpu_custom_call.1} parent=1 // pred_check
      _
    $region7: #{tpu_custom_call.1} parent=1 // pred_check_branch
      %12 = sbr.rel (0) target = $region9
    $region8: #{tpu_custom_call.1} parent=1 // pred_region
      %14 = vsyncadd [#allocation3], 0
      %s15 = sshll.u32 %s1, 4
      %s16 = int_to_ptr.hbm [resolvable:$true] %s15
      %s17 = sshll.u32 [#allocation2], 4
      %s18 = int_to_ptr.vmem [resolvable:$true] %s17
      %23 = dma.hbm_to_vmem [thread:$0]  %s16, 2176, %s18, [#allocation3], 128, 128, 8
    $region9: #{tpu_custom_call.1} parent=1 // pred_fallthru
      _
    // Predicated region
    $region10: #{tpu_custom_call.1} parent=1 // pred_check
      _
    $region11: #{tpu_custom_call.1} parent=1 // pred_check_branch
      %25 = sbr.rel (0) target = $region13
    $region12: #{tpu_custom_call.1} parent=1 // pred_region
      %27 = dma.done [#allocation3], 2176
    $region13: #{tpu_custom_call.1} parent=1 // pred_fallthru
      _
    %s28 = smul.u32 0, 136
    %v29 = vld [vmem:[%s0] sm:$0xff]
    %v30 = vld [vmem:[%s0 + $0x8] sm:$0xff]
    %v31 = vstv %s28
    %v32 = vsub.s32 %v29, %v31
    %v33 = vsub.s32 %v30, %v31
    %v34 = vlaneseq
    %v35 = vand.u32 %v34, 127
    %v36 = vadd.s32 %v35, 128
    %37 = vset.pattern.permute.xlu0 0
    %38 = vperm.xlu0 %37, %v32
    %v39 = vpop.permute.xlu0 %38
    %40 = vset.pattern.permute.xlu0 0
    %41 = vperm.xlu0 %40, %v33
    %v42 = vpop.permute.xlu0 %41
    %vm43 = vcmp.eq.s32.totalorder %v35, %v39
    %vm44 = vcmp.eq.s32.totalorder %v36, %v39
    %vm45 = vcmp.eq.s32.totalorder %v35, %v42
    %vm46 = vcmp.eq.s32.totalorder %v36, %v42
    %v47 = vsel %vm43, 1, 0
    %v48 = vsel %vm44, 1, 0
    %v49 = vsel %vm45, 1, 0
    %v50 = vsel %vm46, 1, 0
    %v51 = vcvt.s32.f32 %v47
    %v52 = vcvt.s32.f32 %v48
    %v53 = vcvt.s32.f32 %v49
    %v54 = vcvt.s32.f32 %v50
    %v55 = vld [vmem:[#allocation2] sm:$0xff]
    %v56 = vld [vmem:[#allocation2 + $0x8] sm:$0xff]
    %v57 = vld [vmem:[#allocation2 + $0x10] sm:$0xff]
    %v58 = vld [vmem:[#allocation2 + $0x18] sm:$0xff]
    %v59 = vld [vmem:[#allocation2 + $0x20] sm:$0xff]
    %v60 = vld [vmem:[#allocation2 + $0x28] sm:$0xff]
    %v61 = vld [vmem:[#allocation2 + $0x30] sm:$0xff]
    %v62 = vld [vmem:[#allocation2 + $0x38] sm:$0xff]
    %v63 = vld [vmem:[#allocation2 + $0x40] sm:$0xff]
    %v64 = vld [vmem:[#allocation2 + $0x48] sm:$0xff]
    %v65 = vld [vmem:[#allocation2 + $0x50] sm:$0xff]
    %v66 = vld [vmem:[#allocation2 + $0x58] sm:$0xff]
    %v67 = vld [vmem:[#allocation2 + $0x60] sm:$0xff]
    %v68 = vld [vmem:[#allocation2 + $0x68] sm:$0xff]
    %v69 = vld [vmem:[#allocation2 + $0x70] sm:$0xff]
    %v70 = vld [vmem:[#allocation2 + $0x78] sm:$0xff]
    %v71 = vld [vmem:[#allocation2 + $0x80] sm:$0xff]
    %vm72 = vcmask 64512
    %v74 = vsel %vm72, %v52, 0
    %v77 = vsel %vm72, %v54, 0
    %79 = vmatpush.msra.mxu0 %v70
    %80 = vmatpush.msra.mxu0 %v69
    %81 = vmatpush.msra.mxu0 %v68
    %82 = vmatpush.msra.mxu0 %v67
    %83 = vmatpush.msra.mxu0 %v66
    %84 = vmatpush.msra.mxu0 %v65
    %85 = vmatpush.msra.mxu0 %v64
    %86 = vmatpush.msra.mxu0 %v63
    %87 = vmatpush.msra.mxu0 %v62
    %88 = vmatpush.msra.mxu0 %v61
    %89 = vmatpush.msra.mxu0 %v60
    %90 = vmatpush.msra.mxu0 %v59
    %91 = vmatpush.msra.mxu0 %v58
    %92 = vmatpush.msra.mxu0 %v57
    %93 = vmatpush.msra.mxu0 %v56
    %94 = vmatpush.msra.mxu0 %v55
    %95 = vmatmul.f32.gmra.mxu0 %v51
    %v96 = vpop.f32.mrf.mxu0
    %v97 = vadd.f32 0.0, %v96
    %98 = vmatmul.f32.gmra.mxu0 %v53
    %v99 = vpop.f32.mrf.mxu0
    %v100 = vadd.f32 0.0, %v99
    %101 = vdwg.mxu0
    %102 = vmatpush.msra.mxu0 0.0
    %103 = vmatpush.msra.mxu0 0.0
    %104 = vmatpush.msra.mxu0 0.0
    %105 = vmatpush.msra.mxu0 0.0
    %106 = vmatpush.msra.mxu0 0.0
    %107 = vmatpush.msra.mxu0 0.0
    %108 = vmatpush.msra.mxu0 0.0
    %109 = vmatpush.msra.mxu0 0.0
    %110 = vmatpush.msra.mxu0 0.0
    %111 = vmatpush.msra.mxu0 0.0
    %112 = vmatpush.msra.mxu0 0.0
    %113 = vmatpush.msra.mxu0 0.0
    %114 = vmatpush.msra.mxu0 0.0
    %115 = vmatpush.msra.mxu0 0.0
    %116 = vmatpush.msra.mxu0 0.0
    %117 = vmatpush.msra.mxu0 %v71
    %118 = vmatmul.f32.gmra.mxu0 %v74
    %v119 = vpop.f32.mrf.mxu0
    %v120 = vadd.f32 %v97, %v119
    %121 = vmatmul.f32.gmra.mxu0 %v77
    %v122 = vpop.f32.mrf.mxu0
    %v123 = vadd.f32 %v100, %v122
    %124 = vdwg.mxu0
    %p125 = scmp.eq.s32.totalorder 0, 0
    // Predicated region
    $region14: #{tpu_custom_call.1} parent=1 // pred_check
      %p126 = pneg %p125
    $region15: #{tpu_custom_call.1} parent=1 // pred_check_branch
      %128 = sbr.rel (%p126) target = $region17
    $region16: #{tpu_custom_call.1} parent=1 // pred_region
      %129 = vst [vmem:[#allocation5] sm:$0xff] %v120
      %130 = vst [vmem:[#allocation5 + $0x8] sm:$0xff] %v123
    $region17: #{tpu_custom_call.1} parent=1 // pred_fallthru
      _
    %p131 = scmp.gt.s32.totalorder 0, 0
    // Predicated region
    $region18: #{tpu_custom_call.1} parent=1 // pred_check
      %p132 = pneg %p131
    $region19: #{tpu_custom_call.1} parent=1 // pred_check_branch
      %134 = sbr.rel (%p132) target = $region21
    $region20: #{tpu_custom_call.1} parent=1 // pred_region
      %v135 = vld [vmem:[#allocation5] sm:$0xff]
      %v136 = vld [vmem:[#allocation5 + $0x8] sm:$0xff]
      %v137 = vadd.f32 %v135, %v120
      %v138 = vadd.f32 %v136, %v123
      %139 = vst [vmem:[#allocation5] sm:$0xff] %v137
      %140 = vst [vmem:[#allocation5 + $0x8] sm:$0xff] %v138
    $region21: #{tpu_custom_call.1} parent=1 // pred_fallthru
      _
    // Predicated region
    $region22: #{tpu_custom_call.1} parent=1 // pred_check
      _
    $region23: #{tpu_custom_call.1} parent=1 // pred_check_branch
      %142 = sbr.rel (0) target = $region25
    $region24: #{tpu_custom_call.1} parent=1 // pred_region
      %144 = vsyncadd [#allocation4], 0
      %s145 = sshll.u32 [#allocation5], 4
      %s146 = int_to_ptr.vmem [resolvable:$true] %s145
      %s147 = sshll.u32 %s2, 4
      %s148 = int_to_ptr.hbm [resolvable:$true] %s147
      %153 = dma.vmem_to_hbm [thread:$0]  %s146, 256, %s148, [#allocation4], 128, 128, 8
    $region25: #{tpu_custom_call.1} parent=1 // pred_fallthru
      _
    // Predicated region
    $region26: #{tpu_custom_call.1} parent=1 // pred_check
      _
    $region27: #{tpu_custom_call.1} parent=1 // pred_check_branch
      %155 = sbr.rel (0) target = $region29
    $region28: #{tpu_custom_call.1} parent=1 // pred_region
      %157 = dma.done [#allocation4], 256
    $region29: #{tpu_custom_call.1} parent=1 // pred_fallthru
      _
    %158 = vsyncpa [#allocation3], 1
    %159 = vsyncpa [#allocation4], 1

</llo_original>
